<compile_context>
chip_gen: v7x
topology: tpu7x:2x2x1
jax: 0.10.0
libtpu: 0.0.40
codegen_flags: <defaults>
</compile_context>

<pallas_src>
import functools

import jax
import jax.numpy as jnp
from jax.experimental import pallas as pl
from jax.experimental.pallas import tpu as pltpu


# ---------------------------------------------------------------------------
# Pallas kernel: prompt composition + layout fold (HBM-bandwidth bound)
# ---------------------------------------------------------------------------
def _compose_fold_kernel(w_ref, p_ref, out_ref, *, batch, num_tasks,
                         n_head, n_embd):
    """One (layer, k/v) slot per grid step.

    w_ref   : (B, N) float32 in SMEM   -- roll-folded composition weights
    p_ref   : (N, 1, S, H*E) in VMEM   -- prompt block for this slot (streamed)
    out_ref : (1, B*H, S, E) in VMEM   -- block of the (L*2, B*H, S, E) output
    """
    for b in range(batch):
        # VPU broadcast-FMA over the tiny contraction dim N; f32 accumulation
        # even if the prompt bank is stored in bf16.
        acc = w_ref[b, 0] * p_ref[0, 0].astype(jnp.float32)
        for n in range(1, num_tasks):
            acc = acc + w_ref[b, n] * p_ref[n, 0].astype(jnp.float32)
        # (S, H*E) -> H slices of (S, E), written straight into the
        # (L, 2, B, H, S, E) target layout: no post-kernel transpose/stack.
        for h in range(n_head):
            out_ref[0, b * n_head + h] = (
                acc[:, h * n_embd:(h + 1) * n_embd].astype(out_ref.dtype))


def compose_prompts_pallas(w_eff, prompts, *, pre_seq_len, n_head, n_embd):
    """out[l*2+c, b*H+h, s, e] = sum_n w_eff[b,n] * prompts[n, l, c*S+s, h*E+e]."""
    B, N = w_eff.shape
    Np, L, two_s, HE = prompts.shape
    assert Np == N
    assert two_s == 2 * pre_seq_len
    assert HE == n_head * n_embd
    S = pre_seq_len
    L2 = 2 * L
    dtype = prompts.dtype
    isz = jnp.dtype(dtype).itemsize

    # Free (row-major compatible) reshape: (N, L, 2S, HE) -> (N, L*2, S, HE).
    prompts_r = prompts.reshape(N, L2, S, HE)

    # Per-step double-buffered footprint (+ slack); generation-aware enough:
    # at these shapes it stays far below v7x's 64 MiB physical per-TC VMEM.
    in_block_bytes = N * S * HE * isz
    out_block_bytes = B * n_head * S * n_embd * isz
    vmem_limit = int(min(max(2 * (in_block_bytes + out_block_bytes) + (4 << 20),
                             8 << 20), 128 << 20))

    kernel = functools.partial(_compose_fold_kernel, batch=B, num_tasks=N,
                               n_head=n_head, n_embd=n_embd)

    flops = 2 * B * N * L2 * S * HE
    bytes_accessed = (N + B) * L2 * S * HE * isz + B * N * 4

    out = pl.pallas_call(
        kernel,
        out_shape=jax.ShapeDtypeStruct((L2, B * n_head, S, n_embd), dtype),
        grid=(L2,),
        in_specs=[
            # Tiny weight table lives in SMEM; scalars are read per (b, n).
            pl.BlockSpec(memory_space=pltpu.MemorySpace.SMEM),
            # Prompt block for one (layer, k/v) slot, streamed from HBM.
            pl.BlockSpec((N, 1, S, HE), lambda g: (0, g, 0, 0)),
        ],
        out_specs=pl.BlockSpec((1, B * n_head, S, n_embd),
                               lambda g: (g, 0, 0, 0)),
        compiler_params=pltpu.CompilerParams(
            # Every (layer, k/v) step is independent -> megacore-safe on v7x;
            # grid = 2*L is even and >= 4 for any L >= 2.
            dimension_semantics=("parallel",),
            vmem_limit_bytes=vmem_limit),
        cost_estimate=pl.CostEstimate(flops=flops, transcendentals=0,
                                      bytes_accessed=bytes_accessed),
    )(w_eff.astype(jnp.float32), prompts_r)
    return out  # (L*2, B*H, S, E)


# ---------------------------------------------------------------------------
# Forward wrapper (mirrors PrefixQKVEncoder.forward, global_compose, eval)
# ---------------------------------------------------------------------------
def prefix_qkv_encoder_forward(x_query, keys, prompts, *, num_layers,
                               pre_seq_len, n_head, n_embd,
                               softmax_match_scale, task_limit):
    B = x_query.shape[0]
    num_tasks = keys.shape[0]

    # task_list roll: task_list[task_limit:] = task_list[:n - task_limit]
    # (contains duplicates, i.e. NOT a permutation).
    task_list = list(range(num_tasks))
    task_list[task_limit:] = task_list[:num_tasks - task_limit]
    real_ids = jnp.asarray(task_list, dtype=jnp.int32)

    # --- match / softmax / roll-fold: tiny, plain JAX (no pallas dispatch) ---
    K = keys[real_ids].astype(jnp.float32)                  # (N, key_dim)
    q = x_query.astype(jnp.float32)
    eps = jnp.float32(1e-12)
    q_n = q / jnp.maximum(jnp.linalg.norm(q, axis=-1, keepdims=True), eps)
    k_n = K / jnp.maximum(jnp.linalg.norm(K, axis=-1, keepdims=True), eps)
    cos_sim = q_n @ k_n.T                                   # (B, N)
    w = jax.nn.softmax(cos_sim * jnp.float32(softmax_match_scale), axis=-1)

    # Fold the roll (scatter-add over duplicate ids) into the weights so the
    # big compose streams the ORIGINAL prompt bank once from HBM, un-gathered.
    roll_map = (real_ids[:, None] ==
                jnp.arange(num_tasks, dtype=jnp.int32)[None, :]
                ).astype(jnp.float32)                       # (N, num_tasks)
    w_eff = w @ roll_map                                    # (B, num_tasks) f32

    # --- Pallas: bandwidth-bound compose, output written directly in the
    #     past_key_values layout ---
    out = compose_prompts_pallas(w_eff, prompts, pre_seq_len=pre_seq_len,
                                 n_head=n_head, n_embd=n_embd)

    # Free reshape: (L*2, B*H, S, E) -> (L, 2, B, H, S, E).
    pkv = out.reshape(num_layers, 2, B, n_head, pre_seq_len, n_embd)

    # torch past_key_values.split(2): tuple of L tensors (2, B, H, S, E).
    past_key_values = tuple(pkv[l] for l in range(num_layers))
    loss = jnp.float32(0.0)
    return past_key_values, w, loss


# ---------------------------------------------------------------------------
# Pure-JAX reference (same math, for the sanity check)
# ---------------------------------------------------------------------------
def _reference(x_query, keys, prompts, *, softmax_match_scale, task_limit):
    num_tasks = keys.shape[0]
    task_list = list(range(num_tasks))
    task_list[task_limit:] = task_list[:num_tasks - task_limit]
    real_ids = jnp.asarray(task_list, dtype=jnp.int32)
    K = keys[real_ids]
    P = prompts[real_ids]
    eps = 1e-12
    q_n = x_query / jnp.maximum(jnp.linalg.norm(x_query, axis=1, keepdims=True), eps)
    k_n = K / jnp.maximum(jnp.linalg.norm(K, axis=1, keepdims=True), eps)
    cos_sim = jnp.einsum('bj,kj->bk', q_n, k_n)
    w = jax.nn.softmax(cos_sim * softmax_match_scale, axis=-1)
    P_ = jnp.einsum('bn,nkld->bkld', w, P)
    return w, P_.reshape(x_query.shape[0], -1)


if __name__ == "__main__":
    # Small, module-consistent shapes.
    batch = 2
    num_tasks = 4            # cl_language_list with 4 languages
    key_dim = 32
    num_layers = 2
    pre_seq_len = 4
    n_head = 2
    n_embd = 8               # hidden_size=16, num_attention_heads=2
    softmax_match_scale = 4.0
    task_limit = 2

    root = jax.random.PRNGKey(0)
    k_q, k_keys, k_prompts = jax.random.split(root, 3)

    x_query = jax.random.normal(k_q, (batch, key_dim), dtype=jnp.float32)
    keys = jax.random.normal(k_keys, (num_tasks, key_dim), dtype=jnp.float32)
    prompts = jax.random.normal(
        k_prompts,
        (num_tasks, num_layers, 2 * pre_seq_len, n_head * n_embd),
        dtype=jnp.float32)
    # NOTE: prompts may be supplied as bf16 to halve the dominant HBM stream;
    # the kernel keeps the weights in f32 and accumulates in f32 (looser
    # output tolerance applies). Kept f32 here for the tight sanity check.

    past_key_values, w, loss = prefix_qkv_encoder_forward(
        x_query, keys, prompts,
        num_layers=num_layers, pre_seq_len=pre_seq_len,
        n_head=n_head, n_embd=n_embd,
        softmax_match_scale=softmax_match_scale, task_limit=task_limit)

    jax.block_until_ready(past_key_values)
    jax.block_until_ready(w)

    # Sanity check against a pure-JAX reference of the same math.
    w_ref, p_ref = _reference(
        x_query, keys, prompts,
        softmax_match_scale=softmax_match_scale, task_limit=task_limit)
    pkv_flat = jnp.stack(past_key_values)            # (L, 2, B, H, S, E)
    p_got = jnp.transpose(pkv_flat, (2, 0, 1, 4, 3, 5)).reshape(batch, -1)
    assert past_key_values[0].shape == (2, batch, n_head, pre_seq_len, n_embd)
    assert jnp.allclose(w, w_ref, atol=1e-5, rtol=1e-5)
    assert jnp.allclose(p_got, p_ref, atol=1e-4, rtol=1e-4)
    assert float(loss) == 0.0

    print("KERNEL_OK")
</pallas_src>

<mosaic_0001>
module attributes {stable_mosaic.version = 11 : i64} {
  func.func @_compose_fold_kernel(%arg0: i32, %arg1: memref<2x4xf32, #tpu.memory_space<smem>>, %arg2: memref<4x1x4x16xf32, #tpu.memory_space<vmem>>, %arg3: memref<1x4x4x8xf32, #tpu.memory_space<vmem>>) attributes {dimension_semantics = [#tpu.dimension_semantics<parallel>], iteration_bounds = array<i64: 4>, scalar_prefetch = 0 : i64, scratch_operands = 0 : i64, tpu.core_type = #tpu.core_type<tc>, window_params = [{transform_indices = @transform_0, window_bounds = array<i64: 2, 4>}, {transform_indices = @transform_1, window_bounds = array<i64: 4, 1, 4, 16>}, {transform_indices = @transform_2, window_bounds = array<i64: 1, 4, 4, 8>}]} {
    %c0 = arith.constant 0 : index
    %c0_0 = arith.constant 0 : index
    %0 = memref.load %arg1[%c0, %c0_0] : memref<2x4xf32, #tpu.memory_space<smem>>
    %c0_1 = arith.constant 0 : index
    %c0_2 = arith.constant 0 : index
    %c0_3 = arith.constant 0 : index
    %c0_4 = arith.constant 0 : index
    %1 = vector.load %arg2[%c0_1, %c0_2, %c0_3, %c0_4] : memref<4x1x4x16xf32, #tpu.memory_space<vmem>>, vector<1x1x4x16xf32>
    %2 = vector.shape_cast %1 : vector<1x1x4x16xf32> to vector<4x16xf32>
    %3 = vector.broadcast %0 : f32 to vector<4x16xf32>
    %4 = arith.mulf %3, %2 : vector<4x16xf32>
    %c0_5 = arith.constant 0 : index
    %c1 = arith.constant 1 : index
    %5 = memref.load %arg1[%c0_5, %c1] : memref<2x4xf32, #tpu.memory_space<smem>>
    %c1_6 = arith.constant 1 : index
    %c0_7 = arith.constant 0 : index
    %c0_8 = arith.constant 0 : index
    %c0_9 = arith.constant 0 : index
    %6 = vector.load %arg2[%c1_6, %c0_7, %c0_8, %c0_9] : memref<4x1x4x16xf32, #tpu.memory_space<vmem>>, vector<1x1x4x16xf32>
    %7 = vector.shape_cast %6 : vector<1x1x4x16xf32> to vector<4x16xf32>
    %8 = vector.broadcast %5 : f32 to vector<4x16xf32>
    %9 = arith.mulf %8, %7 : vector<4x16xf32>
    %10 = arith.addf %4, %9 : vector<4x16xf32>
    %c0_10 = arith.constant 0 : index
    %c2 = arith.constant 2 : index
    %11 = memref.load %arg1[%c0_10, %c2] : memref<2x4xf32, #tpu.memory_space<smem>>
    %c2_11 = arith.constant 2 : index
    %c0_12 = arith.constant 0 : index
    %c0_13 = arith.constant 0 : index
    %c0_14 = arith.constant 0 : index
    %12 = vector.load %arg2[%c2_11, %c0_12, %c0_13, %c0_14] : memref<4x1x4x16xf32, #tpu.memory_space<vmem>>, vector<1x1x4x16xf32>
    %13 = vector.shape_cast %12 : vector<1x1x4x16xf32> to vector<4x16xf32>
    %14 = vector.broadcast %11 : f32 to vector<4x16xf32>
    %15 = arith.mulf %14, %13 : vector<4x16xf32>
    %16 = arith.addf %10, %15 : vector<4x16xf32>
    %c0_15 = arith.constant 0 : index
    %c3 = arith.constant 3 : index
    %17 = memref.load %arg1[%c0_15, %c3] : memref<2x4xf32, #tpu.memory_space<smem>>
    %c3_16 = arith.constant 3 : index
    %c0_17 = arith.constant 0 : index
    %c0_18 = arith.constant 0 : index
    %c0_19 = arith.constant 0 : index
    %18 = vector.load %arg2[%c3_16, %c0_17, %c0_18, %c0_19] : memref<4x1x4x16xf32, #tpu.memory_space<vmem>>, vector<1x1x4x16xf32>
    %19 = vector.shape_cast %18 : vector<1x1x4x16xf32> to vector<4x16xf32>
    %20 = vector.broadcast %17 : f32 to vector<4x16xf32>
    %21 = arith.mulf %20, %19 : vector<4x16xf32>
    %22 = arith.addf %16, %21 : vector<4x16xf32>
    %23 = vector.extract_strided_slice %22 {offsets = [0, 0], sizes = [4, 8], strides = [1, 1]} : vector<4x16xf32> to vector<4x8xf32>
    %c0_20 = arith.constant 0 : index
    %c0_21 = arith.constant 0 : index
    %c0_22 = arith.constant 0 : index
    %c0_23 = arith.constant 0 : index
    %24 = vector.load %arg3[%c0_20, %c0_21, %c0_22, %c0_23] : memref<1x4x4x8xf32, #tpu.memory_space<vmem>>, vector<1x1x4x8xf32>
    %25 = vector.shape_cast %24 : vector<1x1x4x8xf32> to vector<4x8xf32>
    %26 = vector.shape_cast %23 : vector<4x8xf32> to vector<1x1x4x8xf32>
    tpu.vector_store %arg3[%c0_20, %c0_21, %c0_22, %c0_23], %26 {strides = array<i32>} : memref<1x4x4x8xf32, #tpu.memory_space<vmem>>, vector<1x1x4x8xf32>,
    %27 = vector.extract_strided_slice %22 {offsets = [0, 8], sizes = [4, 8], strides = [1, 1]} : vector<4x16xf32> to vector<4x8xf32>
    %c0_24 = arith.constant 0 : index
    %c1_25 = arith.constant 1 : index
    %c0_26 = arith.constant 0 : index
    %c0_27 = arith.constant 0 : index
    %28 = vector.load %arg3[%c0_24, %c1_25, %c0_26, %c0_27] : memref<1x4x4x8xf32, #tpu.memory_space<vmem>>, vector<1x1x4x8xf32>
    %29 = vector.shape_cast %28 : vector<1x1x4x8xf32> to vector<4x8xf32>
    %30 = vector.shape_cast %27 : vector<4x8xf32> to vector<1x1x4x8xf32>
    tpu.vector_store %arg3[%c0_24, %c1_25, %c0_26, %c0_27], %30 {strides = array<i32>} : memref<1x4x4x8xf32, #tpu.memory_space<vmem>>, vector<1x1x4x8xf32>,
    %c1_28 = arith.constant 1 : index
    %c0_29 = arith.constant 0 : index
    %31 = memref.load %arg1[%c1_28, %c0_29] : memref<2x4xf32, #tpu.memory_space<smem>>
    %c0_30 = arith.constant 0 : index
    %c0_31 = arith.constant 0 : index
    %c0_32 = arith.constant 0 : index
    %c0_33 = arith.constant 0 : index
    %32 = vector.load %arg2[%c0_30, %c0_31, %c0_32, %c0_33] : memref<4x1x4x16xf32, #tpu.memory_space<vmem>>, vector<1x1x4x16xf32>
    %33 = vector.shape_cast %32 : vector<1x1x4x16xf32> to vector<4x16xf32>
    %34 = vector.broadcast %31 : f32 to vector<4x16xf32>
    %35 = arith.mulf %34, %33 : vector<4x16xf32>
    %c1_34 = arith.constant 1 : index
    %c1_35 = arith.constant 1 : index
    %36 = memref.load %arg1[%c1_34, %c1_35] : memref<2x4xf32, #tpu.memory_space<smem>>
    %c1_36 = arith.constant 1 : index
    %c0_37 = arith.constant 0 : index
    %c0_38 = arith.constant 0 : index
    %c0_39 = arith.constant 0 : index
    %37 = vector.load %arg2[%c1_36, %c0_37, %c0_38, %c0_39] : memref<4x1x4x16xf32, #tpu.memory_space<vmem>>, vector<1x1x4x16xf32>
    %38 = vector.shape_cast %37 : vector<1x1x4x16xf32> to vector<4x16xf32>
    %39 = vector.broadcast %36 : f32 to vector<4x16xf32>
    %40 = arith.mulf %39, %38 : vector<4x16xf32>
    %41 = arith.addf %35, %40 : vector<4x16xf32>
    %c1_40 = arith.constant 1 : index
    %c2_41 = arith.constant 2 : index
    %42 = memref.load %arg1[%c1_40, %c2_41] : memref<2x4xf32, #tpu.memory_space<smem>>
    %c2_42 = arith.constant 2 : index
    %c0_43 = arith.constant 0 : index
    %c0_44 = arith.constant 0 : index
    %c0_45 = arith.constant 0 : index
    %43 = vector.load %arg2[%c2_42, %c0_43, %c0_44, %c0_45] : memref<4x1x4x16xf32, #tpu.memory_space<vmem>>, vector<1x1x4x16xf32>
    %44 = vector.shape_cast %43 : vector<1x1x4x16xf32> to vector<4x16xf32>
    %45 = vector.broadcast %42 : f32 to vector<4x16xf32>
    %46 = arith.mulf %45, %44 : vector<4x16xf32>
    %47 = arith.addf %41, %46 : vector<4x16xf32>
    %c1_46 = arith.constant 1 : index
    %c3_47 = arith.constant 3 : index
    %48 = memref.load %arg1[%c1_46, %c3_47] : memref<2x4xf32, #tpu.memory_space<smem>>
    %c3_48 = arith.constant 3 : index
    %c0_49 = arith.constant 0 : index
    %c0_50 = arith.constant 0 : index
    %c0_51 = arith.constant 0 : index
    %49 = vector.load %arg2[%c3_48, %c0_49, %c0_50, %c0_51] : memref<4x1x4x16xf32, #tpu.memory_space<vmem>>, vector<1x1x4x16xf32>
    %50 = vector.shape_cast %49 : vector<1x1x4x16xf32> to vector<4x16xf32>
    %51 = vector.broadcast %48 : f32 to vector<4x16xf32>
    %52 = arith.mulf %51, %50 : vector<4x16xf32>
    %53 = arith.addf %47, %52 : vector<4x16xf32>
    %54 = vector.extract_strided_slice %53 {offsets = [0, 0], sizes = [4, 8], strides = [1, 1]} : vector<4x16xf32> to vector<4x8xf32>
    %c0_52 = arith.constant 0 : index
    %c2_53 = arith.constant 2 : index
    %c0_54 = arith.constant 0 : index
    %c0_55 = arith.constant 0 : index
    %55 = vector.load %arg3[%c0_52, %c2_53, %c0_54, %c0_55] : memref<1x4x4x8xf32, #tpu.memory_space<vmem>>, vector<1x1x4x8xf32>
    %56 = vector.shape_cast %55 : vector<1x1x4x8xf32> to vector<4x8xf32>
    %57 = vector.shape_cast %54 : vector<4x8xf32> to vector<1x1x4x8xf32>
    tpu.vector_store %arg3[%c0_52, %c2_53, %c0_54, %c0_55], %57 {strides = array<i32>} : memref<1x4x4x8xf32, #tpu.memory_space<vmem>>, vector<1x1x4x8xf32>,
    %58 = vector.extract_strided_slice %53 {offsets = [0, 8], sizes = [4, 8], strides = [1, 1]} : vector<4x16xf32> to vector<4x8xf32>
    %c0_56 = arith.constant 0 : index
    %c3_57 = arith.constant 3 : index
    %c0_58 = arith.constant 0 : index
    %c0_59 = arith.constant 0 : index
    %59 = vector.load %arg3[%c0_56, %c3_57, %c0_58, %c0_59] : memref<1x4x4x8xf32, #tpu.memory_space<vmem>>, vector<1x1x4x8xf32>
    %60 = vector.shape_cast %59 : vector<1x1x4x8xf32> to vector<4x8xf32>
    %61 = vector.shape_cast %58 : vector<4x8xf32> to vector<1x1x4x8xf32>
    tpu.vector_store %arg3[%c0_56, %c3_57, %c0_58, %c0_59], %61 {strides = array<i32>} : memref<1x4x4x8xf32, #tpu.memory_space<vmem>>, vector<1x1x4x8xf32>,
    return
  }
  func.func @transform_0(%arg0: i32) -> (i32, i32) {
    %c0_i32 = arith.constant 0 : i32
    %c0_i32_0 = arith.constant 0 : i32
    %c0_i32_1 = arith.constant 0 : i32
    return %c0_i32, %c0_i32_0 : i32, i32
  }
  func.func @transform_1(%arg0: i32) -> (i32, i32, i32, i32) {
    %c0_i32 = arith.constant 0 : i32
    %c0_i32_0 = arith.constant 0 : i32
    %c0_i32_1 = arith.constant 0 : i32
    %c0_i32_2 = arith.constant 0 : i32
    return %c0_i32, %arg0, %c0_i32_0, %c0_i32_1 : i32, i32, i32, i32
  }
  func.func @transform_2(%arg0: i32) -> (i32, i32, i32, i32) {
    %c0_i32 = arith.constant 0 : i32
    %c0_i32_0 = arith.constant 0 : i32
    %c0_i32_1 = arith.constant 0 : i32
    %c0_i32_2 = arith.constant 0 : i32
    return %arg0, %c0_i32, %c0_i32_0, %c0_i32_1 : i32, i32, i32, i32
  }
}

</mosaic_0001>

<llo_original>
// kernel: tpu_custom_call.1
$region0: #{tpu_custom_call.1}
  #allocation0 [shape = 'u32[]', space=smem, size = 0x4, offset = 0x4, fixed_abs, tag = 'smem constant byte address 0x4 - core index']
  #allocation1 [shape = 'u32[144,128]{1,0:T(1,128)}', space=vmem, size = 0x12000, scoped, tag = 'internal scratch']
  %s0 = inlined_call_operand.hbm [shape: f32[2,4], index: 0, kind: input, shape index: {}]
  %s1 = inlined_call_operand.hbm [shape: f32[4,4,4,16], index: 1, kind: input, shape index: {}]
  %s2 = inlined_call_operand.hbm [shape: f32[4,4,4,8], index: 2, kind: output, shape index: {}]
  %s3 = sld [smem:[#allocation0]]
  $region49: #{tpu_custom_call.1} parent=0
    _
  %s5 = ssub.s32 1, %s3
  %s6 = scalar_select 0, %s5, %s3
  $region1: #{tpu_custom_call.1} parent=0
    #allocation2 [shape = 'u8[1024]{0}', space=smem, size = 0x400, scoped, tag = 'input window, operand 0, single buffered']
    #allocation3 [shape = 's32[2]{0}', space=sflag, size = 0x8, scoped, tag = 'scoped memory for tpu_custom_call.1']
    #allocation4 [shape = 's32[2]{0}', space=sflag, size = 0x8, scoped, tag = 'scoped memory for tpu_custom_call.1']
    #allocation5 [shape = 's32[2]{0}', space=sflag, size = 0x8, scoped, tag = 'scoped memory for tpu_custom_call.1']
    #allocation6 [shape = 'u8[16384]{0}', space=vmem, size = 0x4000, scoped, tag = 'input window, operand 1']
    #allocation7 [shape = 'u8[16384]{0}', space=vmem, size = 0x4000, scoped, tag = 'output window, operand 0']
    %7 = vsyncpa [#allocation5], 0
    %8 = vsyncpa [#allocation3], 0
    %s9 = scalar_lea.sflag [#allocation3], 1
    %10 = vsyncpa %s9, 0
    %11 = vsyncpa [#allocation4], 0
    %s12 = scalar_lea.sflag [#allocation4], 1
    %13 = vsyncpa %s12, 0
    loop: start=0, step=1, limit=6
    $region2: #{tpu_custom_call.1} parent=1 // loop_pre_header
      _
    $region3: #{tpu_custom_call.1} parent=1 // loop_header
      %s15 = sphi 0, %s19
      %p16 = scmp.ge.s32.totalorder %s15, 6
      %s23 = sphi 0, %s23
      %s25 = sphi 0, %s23
      %s26 = sphi 0, %s25
      %s40 = sphi 0, %s26
      %s46 = sphi 0, %s48
      %s49 = sphi 0, %s46
      %s50 = sphi 0, %s49
      %s66 = sphi 0, %s50
      %s72 = sphi 0, %s74
      %s75 = sphi 0, %s72
      %s76 = sphi 0, %s75
      %s92 = sphi 0, %s76
    $region4: #{tpu_custom_call.1} parent=1 // loop_header_branch
      %18 = sbr.rel (%p16) target = $region8
    $region5: #{tpu_custom_call.1} parent=1 // loop_body
      %s20 = ssub.s32 %s15, 1
      %s21 = ssub.s32 %s15, 2
      %s22 = sadd.s32 %s15, 1
      %s24 = sadd.s32 %s23, 1
      %p27 = scmp.eq.s32.totalorder %s15, 3
      %p28 = scmp.ne.s32.totalorder %s23, %s25
      %p29 = scmp.eq.s32.totalorder %s15, 0
      %p30 = por %p28, %p29
      %p31 = scmp.ne.s32.totalorder %s23, %s25
      %p32 = scmp.eq.s32.totalorder %s20, 3
      %p33 = por %p31, %p32
      %p34 = scmp.ne.s32.totalorder %s25, %s26
      %p35 = scmp.eq.s32.totalorder %s20, 0
      %p36 = por %p34, %p35
      %p37 = scmp.ne.s32.totalorder %s25, %s26
      %p38 = scmp.eq.s32.totalorder %s21, 3
      %p39 = por %p37, %p38
      %p41 = scmp.ne.s32.totalorder %s26, %s40
      %p42 = scmp.eq.s32.totalorder %s21, 0
      %p43 = por %p41, %p42
      %s44 = ssub.s32 %s15, %s22
      %p45 = scmp.eq.s32.totalorder %s44, 0
      %s47 = sadd.s32 %s46, 1
      %s48 = scalar_select %p45, %s46, %s47
      %p51 = pneg %p45
      %p52 = scmp.eq.s32.totalorder %s15, 3
      %p53 = por %p51, %p52
      %p54 = scmp.ne.s32.totalorder %s46, %s49
      %p55 = scmp.eq.s32.totalorder %s15, 0
      %p56 = por %p54, %p55
      %p57 = scmp.ne.s32.totalorder %s46, %s49
      %p58 = scmp.eq.s32.totalorder %s20, 3
      %p59 = por %p57, %p58
      %p60 = scmp.ne.s32.totalorder %s49, %s50
      %p61 = scmp.eq.s32.totalorder %s20, 0
      %p62 = por %p60, %p61
      %p63 = scmp.ne.s32.totalorder %s49, %s50
      %p64 = scmp.eq.s32.totalorder %s21, 3
      %p65 = por %p63, %p64
      %p67 = scmp.ne.s32.totalorder %s50, %s66
      %p68 = scmp.eq.s32.totalorder %s21, 0
      %p69 = por %p67, %p68
      %s70 = ssub.s32 %s15, %s22
      %p71 = scmp.eq.s32.totalorder %s70, 0
      %s73 = sadd.s32 %s72, 1
      %s74 = scalar_select %p71, %s72, %s73
      %p77 = pneg %p71
      %p78 = scmp.eq.s32.totalorder %s15, 3
      %p79 = por %p77, %p78
      %p80 = scmp.ne.s32.totalorder %s72, %s75
      %p81 = scmp.eq.s32.totalorder %s15, 0
      %p82 = por %p80, %p81
      %p83 = scmp.ne.s32.totalorder %s72, %s75
      %p84 = scmp.eq.s32.totalorder %s20, 3
      %p85 = por %p83, %p84
      %p86 = scmp.ne.s32.totalorder %s75, %s76
      %p87 = scmp.eq.s32.totalorder %s20, 0
      %p88 = por %p86, %p87
      %p89 = scmp.ne.s32.totalorder %s75, %s76
      %p90 = scmp.eq.s32.totalorder %s21, 3
      %p91 = por %p89, %p90
      %p93 = scmp.ne.s32.totalorder %s76, %s92
      %p94 = scmp.eq.s32.totalorder %s21, 0
      %p95 = por %p93, %p94
      %p96 = scmp.le.s32.totalorder 1, %s15
      %p97 = scmp.lt.s32.totalorder %s15, 5
      %p98 = pnand %p96, %p97
      %p99 = pneg %p98
      // Predicated region
      $region9: #{tpu_custom_call.1} parent=5 // pred_check
        _
      $region10: #{tpu_custom_call.1} parent=5 // pred_check_branch
        %101 = sbr.rel (%p98) target = $region12
      $region11: #{tpu_custom_call.1} parent=5 // pred_region
        %s102 = ssub.s32 %s15, 1
        // Predicated region
        $region13: #{tpu_custom_call.1} parent=11 // pred_check
          %p103 = pneg %p36
        $region14: #{tpu_custom_call.1} parent=11 // pred_check_branch
          %105 = sbr.rel (%p103) target = $region16
        $region15: #{tpu_custom_call.1} parent=11 // pred_region
          %s107 = ssub.s32 32, 32
          %108 = vsyncadd [#allocation5], %s107
          %111 = dma.hbm_to_smem %s0, 32, [#allocation2], [#allocation5]
        $region16: #{tpu_custom_call.1} parent=11 // pred_fallthru
          _
      $region12: #{tpu_custom_call.1} parent=5 // pred_fallthru
        _
      %p112 = scmp.lt.s32.totalorder %s15, 4
      // Predicated region
      $region17: #{tpu_custom_call.1} parent=5 // pred_check
        %p113 = pneg %p112
      $region18: #{tpu_custom_call.1} parent=5 // pred_check_branch
        %115 = sbr.rel (%p113) target = $region20
      $region19: #{tpu_custom_call.1} parent=5 // pred_region
        // Predicated region
        $region21: #{tpu_custom_call.1} parent=19 // pred_check
          %p116 = pneg %p56
        $region22: #{tpu_custom_call.1} parent=19 // pred_check_branch
          %118 = sbr.rel (%p116) target = $region24
        $region23: #{tpu_custom_call.1} parent=19 // pred_region
          %s119 = sand.u32 %s46, 1
          %s120 = scalar_lea.sflag [#allocation3], %s119
          %s121 = sand.u32 %s46, 1
          %s122 = smul.addr %s121, 16
          %s123 = scalar_lea.vmem [#allocation6], %s122
          %s125 = ssub.s32 256, 256
          %126 = vsyncadd %s120, %s125
          %s127 = smul.addr %s15, 64
          %s128 = scalar_lea.hbm %s1, %s127
          %s129 = sshll.u32 %s123, 4
          %s130 = int_to_ptr.vmem [resolvable:$true] %s129
          %135 = dma.hbm_to_vmem [thread:$0]  %s128, 256, %s130, %s120, 256, 64, 4
        $region24: #{tpu_custom_call.1} parent=19 // pred_fallthru
          _
      $region20: #{tpu_custom_call.1} parent=5 // pred_fallthru
        _
      %p136 = scmp.le.s32.totalorder 1, %s15
      %p137 = scmp.lt.s32.totalorder %s15, 5
      %p138 = pnand %p136, %p137
      %p139 = pneg %p138
      // Predicated region
      $region25: #{tpu_custom_call.1} parent=5 // pred_check
        _
      $region26: #{tpu_custom_call.1} parent=5 // pred_check_branch
        %141 = sbr.rel (%p138) target = $region28
      $region27: #{tpu_custom_call.1} parent=5 // pred_region
        %s142 = ssub.s32 %s15, 1
        // Predicated region
        $region29: #{tpu_custom_call.1} parent=27 // pred_check
          %p143 = pneg %p36
        $region30: #{tpu_custom_call.1} parent=27 // pred_check_branch
          %145 = sbr.rel (%p143) target = $region32
        $region31: #{tpu_custom_call.1} parent=27 // pred_region
          %146 = dma.done [#allocation5], 32
        $region32: #{tpu_custom_call.1} parent=27 // pred_fallthru
          _
        %s147 = sand.u32 %s49, 1
        %s148 = scalar_lea.sflag [#allocation3], %s147
        %s149 = sand.u32 %s49, 1
        %s150 = smul.addr %s149, 16
        %s151 = scalar_lea.vmem [#allocation6], %s150
        // Predicated region
        $region33: #{tpu_custom_call.1} parent=27 // pred_check
          %p152 = pneg %p62
        $region34: #{tpu_custom_call.1} parent=27 // pred_check_branch
          %154 = sbr.rel (%p152) target = $region36
        $region35: #{tpu_custom_call.1} parent=27 // pred_region
          %155 = dma.done %s148, 256
        $region36: #{tpu_custom_call.1} parent=27 // pred_fallthru
          _
        %156 = sfence
        %p157 = pneg %p36
        %p158 = pneg %p33
        %s159 = sand.u32 %s49, 1
        %s160 = scalar_lea.sflag [#allocation3], %s159
        %s161 = sand.u32 %s49, 1
        %s162 = smul.addr %s161, 16
        %s163 = scalar_lea.vmem [#allocation6], %s162
        %p164 = pneg %p62
        %p165 = pneg %p59
        %p166 = pneg %p88
        %p167 = pneg %p85
        %s168 = sand.u32 %s75, 1
        %s169 = scalar_lea.sflag [#allocation4], %s168
        %s170 = sand.u32 %s75, 1
        %s171 = smul.addr %s170, 16
        %s172 = scalar_lea.vmem [#allocation7], %s171
        %s173 = sld [smem:[#allocation2]]
        %v174 = vld [vmem:[%s151] sm:$0xf]
        %v175 = vstv %s173
        %v176 = vmul.f32 %v175, %v174
        %s177 = sld [smem:[#allocation2 + $0x1]]
        %s178 = scalar_lea.vmem %s151, 4 [#allocation6]
        %v179 = vld [vmem:[%s178] sm:$0xf]
        %v180 = vstv %s177
        %v181 = vmul.f32 %v180, %v179
        %v182 = vadd.f32 %v176, %v181
        %s183 = sld [smem:[#allocation2 + $0x2]]
        %s184 = scalar_lea.vmem %s151, 8 [#allocation6]
        %v185 = vld [vmem:[%s184] sm:$0xf]
        %v186 = vstv %s183
        %v187 = vmul.f32 %v186, %v185
        %v188 = vadd.f32 %v182, %v187
        %s189 = sld [smem:[#allocation2 + $0x3]]
        %s190 = scalar_lea.vmem %s151, 12 [#allocation6]
        %v191 = vld [vmem:[%s190] sm:$0xf]
        %v192 = vstv %s189
        %v193 = vmul.f32 %v192, %v191
        %v194 = vadd.f32 %v188, %v193
        %vm195 = vcmask 60416
        %196 = vst.msk [vmem:[%s172] sm:$0xf] %vm195, %v194
        %198 = vrot.lane.b32.xlu0 %v194, 120
        %v199 = vpop.permute.xlu0 %198
        %s201 = scalar_lea.vmem %s172, 4 [#allocation7]
        %202 = vst.msk [vmem:[%s201] sm:$0xf] %vm195, %v199
        %s203 = sld [smem:[#allocation2 + $0x80]]
        %v204 = vld [vmem:[%s151] sm:$0xf]
        %v205 = vstv %s203
        %v206 = vmul.f32 %v205, %v204
        %s207 = sld [smem:[#allocation2 + $0x81]]
        %v208 = vld [vmem:[%s178] sm:$0xf]
        %v209 = vstv %s207
        %v210 = vmul.f32 %v209, %v208
        %v211 = vadd.f32 %v206, %v210
        %s212 = sld [smem:[#allocation2 + $0x82]]
        %v213 = vld [vmem:[%s184] sm:$0xf]
        %v214 = vstv %s212
        %v215 = vmul.f32 %v214, %v213
        %v216 = vadd.f32 %v211, %v215
        %s217 = sld [smem:[#allocation2 + $0x83]]
        %v218 = vld [vmem:[%s190] sm:$0xf]
        %v219 = vstv %s217
        %v220 = vmul.f32 %v219, %v218
        %v221 = vadd.f32 %v216, %v220
        %s222 = scalar_lea.vmem %s172, 8 [#allocation7]
        %223 = vst.msk [vmem:[%s222] sm:$0xf] %vm195, %v221
        %225 = vrot.lane.b32.xlu0 %v221, 120
        %v226 = vpop.permute.xlu0 %225
        %s228 = scalar_lea.vmem %s172, 12 [#allocation7]
        %229 = vst.msk [vmem:[%s228] sm:$0xf] %vm195, %v226
        %s230 = sand.u32 %s75, 1
        %s231 = scalar_lea.sflag [#allocation4], %s230
        %s232 = sand.u32 %s75, 1
        %s233 = smul.addr %s232, 16
        %s234 = scalar_lea.vmem [#allocation7], %s233
        // Predicated region
        $region37: #{tpu_custom_call.1} parent=27 // pred_check
          %p235 = pneg %p85
        $region38: #{tpu_custom_call.1} parent=27 // pred_check_branch
          %237 = sbr.rel (%p235) target = $region40
        $region39: #{tpu_custom_call.1} parent=27 // pred_region
          %s239 = ssub.s32 256, 256
          %240 = vsyncadd %s231, %s239
          %s241 = smul.addr %s20, 4
          %s242 = smul.addr %s241, 64
          %s243 = scalar_lea.hbm %s2, %s242
          %s244 = sshll.u32 %s234, 4
          %s245 = int_to_ptr.vmem [resolvable:$true] %s244
          %250 = dma.vmem_to_hbm [thread:$0]  %s245, 256, %s243, %s231, 64, 64, 4
        $region40: #{tpu_custom_call.1} parent=27 // pred_fallthru
          _
      $region28: #{tpu_custom_call.1} parent=5 // pred_fallthru
        _
      %p251 = scmp.le.s32.totalorder 2, %s15
      // Predicated region
      $region41: #{tpu_custom_call.1} parent=5 // pred_check
        %p252 = pneg %p251
      $region42: #{tpu_custom_call.1} parent=5 // pred_check_branch
        %254 = sbr.rel (%p252) target = $region44
      $region43: #{tpu_custom_call.1} parent=5 // pred_region
        %s255 = ssub.s32 %s15, 2
        // Predicated region
        $region45: #{tpu_custom_call.1} parent=43 // pred_check
          %p256 = pneg %p91
        $region46: #{tpu_custom_call.1} parent=43 // pred_check_branch
          %258 = sbr.rel (%p256) target = $region48
        $region47: #{tpu_custom_call.1} parent=43 // pred_region
          %s259 = sand.u32 %s76, 1
          %s260 = scalar_lea.sflag [#allocation4], %s259
          %s261 = sand.u32 %s76, 1
          %s262 = smul.addr %s261, 16
          %s263 = scalar_lea.vmem [#allocation7], %s262
          %264 = dma.done %s260, 256
        $region48: #{tpu_custom_call.1} parent=43 // pred_fallthru
          _
      $region44: #{tpu_custom_call.1} parent=5 // pred_fallthru
        _
    $region6: #{tpu_custom_call.1} parent=1 // loop_footer
      %s19 = sadd.s32 1, %s15
    $region7: #{tpu_custom_call.1} parent=1 // loop_footer_branch
      %14 = sbr.rel target = $region3
    $region8: #{tpu_custom_call.1} parent=1 // loop_exit
      _
    %265 = vsyncpa [#allocation3], 1
    %s266 = scalar_lea.sflag [#allocation3], 1
    %267 = vsyncpa %s266, 1
    %268 = vsyncpa [#allocation4], 1
    %s269 = scalar_lea.sflag [#allocation4], 1
    %270 = vsyncpa %s269, 1
    %271 = vsyncpa [#allocation5], 1
    %s272 = scalar_lea.sflag [#allocation5], 1
    %273 = vsyncpa %s272, 1

</llo_original>
